<compile_context>
chip_gen: v5e
topology: v5e:2x2
jax: 0.10.0
libtpu: 0.0.40
codegen_flags: <defaults>
</compile_context>

<pallas_src>
import functools

import jax
import jax.numpy as jnp
import numpy as np
from jax.experimental import pallas as pl
from jax.experimental.pallas import tpu as pltpu

OMEGA_0 = 30.0
LANES = 128
SUBLANES = 8


def _round_up(n, m):
    return ((n + m - 1) // m) * m


# ----------------------------------------------------------------------------- kernel
def sine_residual_kernel(x_ref, w_ref, b_ref, o_ref, *, omega_0):
    # x_ref: [TB, Fin]   w_ref: [Fin, 2*Fp]   b_ref: [1, 2*Fp]   o_ref: [TB, Fp]
    fp = o_ref.shape[-1]
    x = x_ref[...]
    if x.dtype != w_ref.dtype:
        # Engage the bf16 MXU path when weights are bf16 (v6e/v7x); f32 accum kept.
        x = x.astype(w_ref.dtype)
    # Single fused, lane-dense MXU matmul covering both the SIREN linear and the
    # shortcut linear (columns [0:Fp] = linear branch, [Fp:2Fp] = shortcut).
    y = jnp.dot(x, w_ref[...], preferred_element_type=jnp.float32)
    y = y + b_ref[...].astype(jnp.float32)
    h = y[:, :fp]          # linear branch   (128-lane aligned slice -> layout free)
    s = y[:, fp:]          # shortcut branch
    out = jnp.sin(omega_0 * h) + s            # sin runs on the EUP, f32 epilogue
    o_ref[...] = jnp.maximum(out, 0.0).astype(o_ref.dtype)


# ----------------------------------------------------------------- param prep (one-time, hoisted)
def prepare_params(w_lin, b_lin, w_sc, b_sc, dtype=jnp.float32):
    """One-time weight prep (out of the hot path).

    - transpose PyTorch [Fout, Fin] weights to [Fin, Fout]
    - zero-pad Fout up to a multiple of 128 lanes (Fp)
    - concatenate [linear | shortcut] along the output axis -> [Fin, 2*Fp]
    Returns (w_fused [Fin, 2*Fp], b_fused [1, 2*Fp], Fout, Fp).

    dtype=jnp.bfloat16 halves weight + x-stream bandwidth on v6e/v7x (the x tile
    is cast in-kernel); accumulation stays f32.  NOTE: SIREN weights are tiny
    (~sqrt(6/Fin)/omega_0) and sin(30*h) amplifies error, so validate bf16
    accuracy separately; the demo below stays f32.
    """
    fout, _ = w_lin.shape
    fp = _round_up(fout, LANES)

    def pad_t(w):  # [Fout, Fin] -> [Fin, Fp]
        return jnp.pad(w.T.astype(dtype), ((0, 0), (0, fp - fout)))

    def pad_b(b):  # [Fout] -> [Fp]
        return jnp.pad(b.astype(dtype), (0, fp - fout))

    w_fused = jnp.concatenate([pad_t(w_lin), pad_t(w_sc)], axis=1)            # [Fin, 2*Fp]
    b_fused = jnp.concatenate([pad_b(b_lin), pad_b(b_sc)]).reshape(1, 2 * fp)
    return w_fused, b_fused, fout, fp


def _resident_spec(shape):
    """Constant-index operand: single-buffered to halve resident VMEM."""
    try:
        return pl.BlockSpec(shape, lambda i: (0, 0), pipeline_mode=pl.Buffered(1))
    except TypeError:  # older jax without pipeline_mode kwarg
        return pl.BlockSpec(shape, lambda i: (0, 0))


# ----------------------------------------------------------------------------- wrapper
@functools.partial(jax.jit, static_argnames=("out_features", "omega_0", "block_rows"))
def sine_residual_block_prepared(x, w_fused, b_fused, *, out_features,
                                 omega_0=OMEGA_0, block_rows=1024):
    """x: [B, Fin]; w_fused: [Fin, 2*Fp]; b_fused: [1, 2*Fp] (from prepare_params)."""
    B, Fin = x.shape
    two_fp = w_fused.shape[1]
    Fp = two_fp // 2

    # Batch tiling: no padding copy -- Pallas handles the ragged last block.
    if B <= SUBLANES:
        TB = B                                            # full-extent block is legal
    else:
        # >= 2 grid steps so the batch axis shards across v7x's 2 TensorCores;
        # 8-sublane aligned rows keep stores unmasked.
        TB = min(block_rows, _round_up(pl.cdiv(B, 2), SUBLANES))
    grid = (pl.cdiv(B, TB),)

    # VMEM budget: single-buffered resident weights/biases, double-buffered x/out
    # tiles, plus the f32 [TB, 2*Fp] matmul epilogue temp.  Clamp <= 40 MiB (v7x).
    x_elt = x.dtype.itemsize
    w_bytes = (w_fused.size * w_fused.dtype.itemsize
               + b_fused.size * b_fused.dtype.itemsize)
    vmem_needed = (w_bytes
                   + 2 * TB * Fin * x_elt          # streamed x tiles (double-buffered)
                   + 2 * TB * Fp * x_elt           # streamed out tiles (double-buffered)
                   + TB * two_fp * 4)              # f32 epilogue temp y
    vmem_limit = int(min(max(vmem_needed + (4 << 20), 16 << 20), 40 << 20))

    cost = pl.CostEstimate(
        flops=2 * B * Fin * two_fp,
        transcendentals=B * Fp,                    # one sin per output element (EUP)
        bytes_accessed=B * Fin * x_elt + w_bytes + B * Fp * x_elt,
    )

    out = pl.pallas_call(
        functools.partial(sine_residual_kernel, omega_0=omega_0),
        out_shape=jax.ShapeDtypeStruct((B, Fp), x.dtype),
        grid=grid,
        in_specs=[
            pl.BlockSpec((TB, Fin), lambda i: (i, 0)),    # streamed x tile
            _resident_spec((Fin, two_fp)),                # resident fused weights
            _resident_spec((1, two_fp)),                  # resident fused biases
        ],
        out_specs=pl.BlockSpec((TB, Fp), lambda i: (i, 0)),  # lane-dense output
        compiler_params=pltpu.CompilerParams(
            dimension_semantics=("parallel",),            # megacore / 2-TC sharding
            vmem_limit_bytes=vmem_limit,
        ),
        cost_estimate=cost,
    )(x, w_fused, b_fused)

    # Lane padding strip only (no batch padding exists).  No-op copy is avoided
    # entirely when out_features is already a multiple of 128.
    if Fp != out_features:
        out = out[:, :out_features]
    return out


def sine_residual_block(x, w_lin, b_lin, w_sc, b_sc, omega_0=OMEGA_0):
    """Convenience wrapper matching the PyTorch forward.  For repeated inference,
    call prepare_params() once and reuse the fused weights instead."""
    w_fused, b_fused, fout, _ = prepare_params(w_lin, b_lin, w_sc, b_sc)
    return sine_residual_block_prepared(x, w_fused, b_fused,
                                        out_features=fout, omega_0=omega_0)


# TODO(synk): if several SineResidualBlocks are stacked, fuse consecutive layers
# into one kernel with all fused weights resident so intermediate [B, F]
# activations never round-trip HBM (largest remaining lever at these sizes).


# ----------------------------------------------------------------------------- init (matches PyTorch)
def init_params(key, in_features, out_features, is_first=False, omega_0=OMEGA_0):
    """Deterministic parameter init matching the PyTorch module's init scheme."""
    k1, k2, k3, k4 = jax.random.split(key, 4)
    if is_first:
        lim = 1.0 / in_features
    else:
        lim = np.sqrt(6.0 / in_features) / omega_0
    w_lin = jax.random.uniform(k1, (out_features, in_features),
                               minval=-lim, maxval=lim, dtype=jnp.float32)
    # nn.Linear default bias init: U(-1/sqrt(fan_in), 1/sqrt(fan_in))
    blim = 1.0 / np.sqrt(in_features)
    b_lin = jax.random.uniform(k2, (out_features,),
                               minval=-blim, maxval=blim, dtype=jnp.float32)
    # shortcut Linear keeps PyTorch defaults: kaiming_uniform(a=sqrt(5)) weight,
    # U(-1/sqrt(fan_in), 1/sqrt(fan_in)) bias
    slim = 1.0 / np.sqrt(in_features)
    w_sc = jax.random.uniform(k3, (out_features, in_features),
                              minval=-slim, maxval=slim, dtype=jnp.float32)
    b_sc = jax.random.uniform(k4, (out_features,),
                              minval=-blim, maxval=blim, dtype=jnp.float32)
    return w_lin, b_lin, w_sc, b_sc


if __name__ == "__main__":
    key = jax.random.PRNGKey(0)
    kx, kp = jax.random.split(key)

    batch = 8
    in_features = 32
    out_features = 64

    x = jax.random.uniform(kx, (batch, in_features),
                           minval=-1.0, maxval=1.0, dtype=jnp.float32)
    w_lin, b_lin, w_sc, b_sc = init_params(kp, in_features, out_features,
                                           is_first=False)

    # One-time weight prep (hoisted out of the hot path), then the kernel call.
    w_fused, b_fused, fout, _ = prepare_params(w_lin, b_lin, w_sc, b_sc)
    out = sine_residual_block_prepared(x, w_fused, b_fused, out_features=fout)
    out = jax.block_until_ready(out)

    # Reference check in plain JAX (same math as the PyTorch forward).
    ref = jnp.maximum(
        jnp.sin(OMEGA_0 * (x @ w_lin.T + b_lin)) + (x @ w_sc.T + b_sc), 0.0)
    np.testing.assert_allclose(np.asarray(out), np.asarray(ref),
                               rtol=1e-5, atol=1e-5)

    print("KERNEL_OK")
</pallas_src>

<mosaic_0001>
module attributes {stable_mosaic.version = 11 : i64} {
  func.func @sine_residual_kernel(%arg0: i32, %arg1: memref<8x32xf32, #tpu.memory_space<vmem>>, %arg2: memref<32x256xf32, #tpu.memory_space<vmem>>, %arg3: memref<1x256xf32, #tpu.memory_space<vmem>>, %arg4: memref<8x128xf32, #tpu.memory_space<vmem>>) attributes {dimension_semantics = [#tpu.dimension_semantics<parallel>], iteration_bounds = array<i64: 1>, scalar_prefetch = 0 : i64, scratch_operands = 0 : i64, tpu.core_type = #tpu.core_type<tc>, window_params = [{transform_indices = @transform_0, window_bounds = array<i64: 8, 32>}, {pipeline_mode = #tpu.pipeline_mode<synchronous>, transform_indices = @transform_1, window_bounds = array<i64: 32, 256>}, {pipeline_mode = #tpu.pipeline_mode<synchronous>, transform_indices = @transform_2, window_bounds = array<i64: 1, 256>}, {transform_indices = @transform_3, window_bounds = array<i64: 8, 128>}]} {
    %c0 = arith.constant 0 : index
    %c0_0 = arith.constant 0 : index
    %0 = vector.load %arg1[%c0, %c0_0] : memref<8x32xf32, #tpu.memory_space<vmem>>, vector<8x32xf32>
    %c0_1 = arith.constant 0 : index
    %c0_2 = arith.constant 0 : index
    %1 = vector.load %arg2[%c0_1, %c0_2] : memref<32x256xf32, #tpu.memory_space<vmem>>, vector<32x256xf32>
    %cst = arith.constant dense<0.000000e+00> : vector<8x256xf32>
    %2 = tpu.matmul %0, %1, %cst {dimension_numbers = #tpu.dot_dimension_numbers<[1], [0], [0], [1], [0, 0, 1, 1], [], []>} : vector<8x32xf32>, vector<32x256xf32>, vector<8x256xf32> -> vector<8x256xf32>
    %c0_3 = arith.constant 0 : index
    %c0_4 = arith.constant 0 : index
    %3 = vector.load %arg3[%c0_3, %c0_4] : memref<1x256xf32, #tpu.memory_space<vmem>>, vector<1x256xf32>
    %4 = vector.broadcast %3 : vector<1x256xf32> to vector<8x256xf32>
    %5 = arith.addf %2, %4 : vector<8x256xf32>
    %6 = vector.extract_strided_slice %5 {offsets = [0, 0], sizes = [8, 128], strides = [1, 1]} : vector<8x256xf32> to vector<8x128xf32>
    %7 = vector.extract_strided_slice %5 {offsets = [0, 128], sizes = [8, 128], strides = [1, 1]} : vector<8x256xf32> to vector<8x128xf32>
    %cst_5 = arith.constant 3.000000e+01 : f32
    %8 = vector.broadcast %cst_5 : f32 to vector<8x128xf32>
    %9 = arith.mulf %8, %6 : vector<8x128xf32>
    %10 = math.sin %9 : vector<8x128xf32>
    %11 = arith.addf %10, %7 : vector<8x128xf32>
    %cst_6 = arith.constant 0.000000e+00 : f32
    %12 = vector.broadcast %cst_6 : f32 to vector<8x128xf32>
    %13 = arith.maximumf %11, %12 : vector<8x128xf32>
    %c0_7 = arith.constant 0 : index
    %c0_8 = arith.constant 0 : index
    %14 = vector.load %arg4[%c0_7, %c0_8] : memref<8x128xf32, #tpu.memory_space<vmem>>, vector<8x128xf32>
    tpu.vector_store %arg4[%c0_7, %c0_8], %13 {strides = array<i32>} : memref<8x128xf32, #tpu.memory_space<vmem>>, vector<8x128xf32>,
    return
  }
  func.func @transform_0(%arg0: i32) -> (i32, i32) {
    %c0_i32 = arith.constant 0 : i32
    %c0_i32_0 = arith.constant 0 : i32
    return %arg0, %c0_i32 : i32, i32
  }
  func.func @transform_1(%arg0: i32) -> (i32, i32) {
    %c0_i32 = arith.constant 0 : i32
    %c0_i32_0 = arith.constant 0 : i32
    %c0_i32_1 = arith.constant 0 : i32
    return %c0_i32, %c0_i32_0 : i32, i32
  }
  func.func @transform_2(%arg0: i32) -> (i32, i32) {
    %c0_i32 = arith.constant 0 : i32
    %c0_i32_0 = arith.constant 0 : i32
    %c0_i32_1 = arith.constant 0 : i32
    return %c0_i32, %c0_i32_0 : i32, i32
  }
  func.func @transform_3(%arg0: i32) -> (i32, i32) {
    %c0_i32 = arith.constant 0 : i32
    %c0_i32_0 = arith.constant 0 : i32
    return %arg0, %c0_i32 : i32, i32
  }
}

</mosaic_0001>

<llo_original>
// kernel: sine_residual_block_prepared.1
$region0: #{sine_residual_block_prepared.1}
  #allocation0 [shape = 'u32[]', space=smem, size = 0x4, offset = 0x4, fixed_abs, tag = 'smem constant byte address 0x4 - core index']
  #allocation1 [shape = 'u32[72,128]{1,0:T(1,128)}', space=vmem, size = 0x9000, scoped, tag = 'internal scratch']
  %s0 = inlined_call_operand.hbm [shape: f32[8,32], index: 0, kind: input, shape index: {}]
  %s1 = inlined_call_operand.hbm [shape: f32[32,256], index: 1, kind: input, shape index: {}]
  %s2 = inlined_call_operand.hbm [shape: f32[1,256], index: 2, kind: input, shape index: {}]
  %s3 = inlined_call_operand.hbm [shape: f32[8,128], index: 3, kind: output, shape index: {}]
  %s4 = sld [smem:[#allocation0]]
  $region34: #{sine_residual_block_prepared.1} parent=0
    _
  %s6 = ssub.s32 1, %s4
  %s7 = scalar_select 0, %s6, %s4
  $region1: #{sine_residual_block_prepared.1} parent=0
    #allocation2 [shape = 'u8[4096]{0}', space=vmem, size = 0x1000, scoped, tag = 'input window, operand 0, single buffered']
    #allocation3 [shape = 's32[1]{0}', space=sflag, size = 0x4, scoped, tag = 'scoped memory for sine_residual_block_prepared.1']
    #allocation4 [shape = 's32[1]{0}', space=sflag, size = 0x4, scoped, tag = 'scoped memory for sine_residual_block_prepared.1']
    #allocation5 [shape = 'u8[32768]{0}', space=vmem, size = 0x8000, scoped, tag = 'input window, operand 1, single buffered']
    #allocation6 [shape = 's32[1]{0}', space=sflag, size = 0x4, scoped, tag = 'scoped memory for sine_residual_block_prepared.1']
    #allocation7 [shape = 'u8[1024]{0}', space=vmem, size = 0x400, scoped, tag = 'input window, operand 2, single buffered']
    #allocation8 [shape = 'u8[4096]{0}', space=vmem, size = 0x1000, scoped, tag = 'output window, operand 0, single buffered']
    %8 = vsyncpa [#allocation3], 0
    %9 = vsyncpa [#allocation6], 0
    %10 = vsyncpa [#allocation4], 0
    // Predicated region
    $region2: #{sine_residual_block_prepared.1} parent=1 // pred_check
      _
    $region3: #{sine_residual_block_prepared.1} parent=1 // pred_check_branch
      %12 = sbr.rel (0) target = $region5
    $region4: #{sine_residual_block_prepared.1} parent=1 // pred_region
      %14 = vsyncadd [#allocation3], 0
      %s16 = sshll.u32 %s0, 4
      %s17 = int_to_ptr.hbm [resolvable:$true] %s16
      %s18 = sshll.u32 [#allocation2], 4
      %s19 = int_to_ptr.vmem [resolvable:$true] %s18
      %21 = dma.hbm_to_vmem [thread:$0]  %s17, 128, %s19, [#allocation3]
    $region5: #{sine_residual_block_prepared.1} parent=1 // pred_fallthru
      _
    // Predicated region
    $region6: #{sine_residual_block_prepared.1} parent=1 // pred_check
      _
    $region7: #{sine_residual_block_prepared.1} parent=1 // pred_check_branch
      %23 = sbr.rel (0) target = $region9
    $region8: #{sine_residual_block_prepared.1} parent=1 // pred_region
      %25 = vsyncadd [#allocation6], 0
      %s26 = sshll.u32 %s1, 4
      %s27 = int_to_ptr.hbm [resolvable:$true] %s26
      %s28 = sshll.u32 [#allocation5], 4
      %s29 = int_to_ptr.vmem [resolvable:$true] %s28
      %34 = dma.hbm_to_vmem [thread:$0]  %s27, 1024, %s29, [#allocation6], 256, 256, 16
    $region9: #{sine_residual_block_prepared.1} parent=1 // pred_fallthru
      _
    // Predicated region
    $region10: #{sine_residual_block_prepared.1} parent=1 // pred_check
      _
    $region11: #{sine_residual_block_prepared.1} parent=1 // pred_check_branch
      %36 = sbr.rel (0) target = $region13
    $region12: #{sine_residual_block_prepared.1} parent=1 // pred_region
      %38 = vsyncadd [#allocation6], 0
      %s40 = sshll.u32 %s2, 4
      %s41 = int_to_ptr.hbm [resolvable:$true] %s40
      %s42 = sshll.u32 [#allocation7], 4
      %s43 = int_to_ptr.vmem [resolvable:$true] %s42
      %45 = dma.hbm_to_vmem [thread:$0]  %s41, 32, %s43, [#allocation6]
    $region13: #{sine_residual_block_prepared.1} parent=1 // pred_fallthru
      _
    // Predicated region
    $region14: #{sine_residual_block_prepared.1} parent=1 // pred_check
      _
    $region15: #{sine_residual_block_prepared.1} parent=1 // pred_check_branch
      %47 = sbr.rel (0) target = $region17
    $region16: #{sine_residual_block_prepared.1} parent=1 // pred_region
      %49 = dma.done [#allocation3], 128
    $region17: #{sine_residual_block_prepared.1} parent=1 // pred_fallthru
      _
    // Predicated region
    $region18: #{sine_residual_block_prepared.1} parent=1 // pred_check
      _
    $region19: #{sine_residual_block_prepared.1} parent=1 // pred_check_branch
      %51 = sbr.rel (0) target = $region21
    $region20: #{sine_residual_block_prepared.1} parent=1 // pred_region
      %53 = dma.done [#allocation6], 1024
    $region21: #{sine_residual_block_prepared.1} parent=1 // pred_fallthru
      _
    // Predicated region
    $region22: #{sine_residual_block_prepared.1} parent=1 // pred_check
      _
    $region23: #{sine_residual_block_prepared.1} parent=1 // pred_check_branch
      %55 = sbr.rel (0) target = $region25
    $region24: #{sine_residual_block_prepared.1} parent=1 // pred_region
      %57 = dma.done [#allocation6], 32
    $region25: #{sine_residual_block_prepared.1} parent=1 // pred_fallthru
      _
    %v58 = vld [vmem:[#allocation2] sm:$0xff]
    %v59 = vld [vmem:[#allocation5] sm:$0xff]
    %v60 = vld [vmem:[#allocation5 + $0x8] sm:$0xff]
    %v61 = vld [vmem:[#allocation5 + $0x10] sm:$0xff]
    %v62 = vld [vmem:[#allocation5 + $0x18] sm:$0xff]
    %v63 = vld [vmem:[#allocation5 + $0x20] sm:$0xff]
    %v64 = vld [vmem:[#allocation5 + $0x28] sm:$0xff]
    %v65 = vld [vmem:[#allocation5 + $0x30] sm:$0xff]
    %v66 = vld [vmem:[#allocation5 + $0x38] sm:$0xff]
    %v67 = vld [vmem:[#allocation7] sm:$0x3]
    %v69 = vperm.slane %v67, 0
    %v70 = vperm.slane %v67, 1
    %vm73 = vcmask 261120
    %v75 = vsel %vm73, %v58, 0
    %77 = vmatpush.msra.mxu0 0.0
    %78 = vmatpush.msra.mxu0 0.0
    %79 = vmatpush.msra.mxu0 0.0
    %80 = vmatpush.msra.mxu0 0.0
    %81 = vmatpush.msra.mxu0 0.0
    %82 = vmatpush.msra.mxu0 0.0
    %83 = vmatpush.msra.mxu0 0.0
    %84 = vmatpush.msra.mxu0 0.0
    %85 = vmatpush.msra.mxu0 0.0
    %86 = vmatpush.msra.mxu0 0.0
    %87 = vmatpush.msra.mxu0 0.0
    %88 = vmatpush.msra.mxu0 0.0
    %89 = vmatpush.msra.mxu0 %v65
    %90 = vmatpush.msra.mxu0 %v63
    %91 = vmatpush.msra.mxu0 %v61
    %92 = vmatpush.msra.mxu0 %v59
    %93 = vmatmul.f32.gmra.mxu0 %v75
    %v94 = vpop.f32.mrf.mxu0
    %v95 = vadd.f32 %v69, %v94
    %96 = vdwg.mxu0
    %97 = vmatpush.msra.mxu0 0.0
    %98 = vmatpush.msra.mxu0 0.0
    %99 = vmatpush.msra.mxu0 0.0
    %100 = vmatpush.msra.mxu0 0.0
    %101 = vmatpush.msra.mxu0 0.0
    %102 = vmatpush.msra.mxu0 0.0
    %103 = vmatpush.msra.mxu0 0.0
    %104 = vmatpush.msra.mxu0 0.0
    %105 = vmatpush.msra.mxu0 0.0
    %106 = vmatpush.msra.mxu0 0.0
    %107 = vmatpush.msra.mxu0 0.0
    %108 = vmatpush.msra.mxu0 0.0
    %109 = vmatpush.msra.mxu0 %v66
    %110 = vmatpush.msra.mxu0 %v64
    %111 = vmatpush.msra.mxu0 %v62
    %112 = vmatpush.msra.mxu0 %v60
    %113 = vmatmul.f32.gmra.mxu0 %v75
    %v114 = vpop.f32.mrf.mxu0
    %v115 = vadd.f32 %v70, %v114
    %116 = vdwg.mxu0
    %v117 = vmul.f32 %v95, 30.0
    %v118 = vand.u32 2147483647, %v117
    %vm119 = vcmp.le.f32.partialorder %v118, 0.7853982
    %vm120 = vcmp.lt.s32.totalorder %v117, 0
    %v121 = vand.u32 %v117, 2139095040
    %v122 = vshrl.u32 %v121, 23
    %v123 = vsub.s32 %v122, 127
    %v124 = vand.u32 2147483647, %v117
    %v125 = vand.u32 %v124, 8388607
    %v126 = vor.u32 %v125, 8388608
    %v127 = vsub.s32 0, %v126
    %v128 = vadd.s32 %v123, 1
    %vm129 = vcmp.gt.s32.totalorder %v128, 0
    %v130 = vsel %vm129, %v128, 0
    %v131 = vshrl.u32 %v130, 5
    %v132 = vand.u32 %v130, 31
    %v133 = vsub.s32 32, %v132
    %v134 = vshrl.u32 683565275, %v133
    %v135 = vshll.u32 683565275, %v132
    %v136 = vshrl.u32 2475754826, %v133
    %v137 = vor.u32 %v135, %v136
    %v138 = vshll.u32 2475754826, %v132
    %v139 = vshrl.u32 2131351028, %v133
    %v140 = vor.u32 %v138, %v139
    %v141 = vshll.u32 2131351028, %v132
    %v142 = vshrl.u32 2102212464, %v133
    %v143 = vor.u32 %v141, %v142
    %v144 = vshll.u32 2102212464, %v132
    %v145 = vshrl.u32 920167782, %v133
    %v146 = vor.u32 %v144, %v145
    %v147 = vshll.u32 920167782, %v132
    %v148 = vshrl.u32 1326507024, %v133
    %v149 = vor.u32 %v147, %v148
    %vm150 = vcmp.lt.s32.totalorder %v131, 1
    %vm151 = vcmp.lt.s32.totalorder %v131, 2
    %vm152 = vcmp.lt.s32.totalorder %v131, 3
    %vm153 = vcmp.lt.s32.totalorder %v131, 4
    %v154 = vsel %vm150, %v134, %v137
    %v155 = vsel %vm153, %v143, 2102212464
    %v156 = vsel %vm152, %v140, %v155
    %v157 = vsel %vm151, %v154, %v156
    %v158 = vsel %vm150, %v137, %v140
    %v159 = vsel %vm153, %v146, 920167782
    %v160 = vsel %vm152, %v143, %v159
    %v161 = vsel %vm151, %v158, %v160
    %v162 = vsel %vm150, %v140, %v143
    %v163 = vsel %vm153, %v149, 1326507024
    %v164 = vsel %vm152, %v146, %v163
    %v165 = vsel %vm151, %v162, %v164
    %v166 = vshll.u32 %v126, 8
    %v167 = vand.u32 %v166, 65535
    %v168 = vshrl.u32 %v166, 16
    %v169 = vand.u32 %v165, 65535
    %v170 = vshrl.u32 %v165, 16
    %v171 = vmul.u32 %v167, %v169
    %v172 = vmul.u32 %v167, %v170
    %v173 = vmul.u32 %v168, %v169
    %v174 = vmul.u32 %v168, %v170
    %v175 = vshll.u32 %v172, 16
    %v176 = vshrl.u32 %v172, 16
    %v177 = vshll.u32 %v173, 16
    %v178 = vshrl.u32 %v173, 16
    %vm179 = vc.u32 %v171, %v175
    %v180 = vsel %vm179, 1, 0
    %v181 = vadd.s32 %v171, %v175
    %v182 = vadd.s32 %v174, %v180
    %vm183 = vc.u32 %v181, %v177
    %v184 = vsel %vm183, 1, 0
    %v185 = vadd.s32 %v181, %v177
    %v186 = vadd.s32 %v182, %v184
    %v187 = vadd.s32 %v186, %v176
    %v188 = vadd.s32 %v187, %v178
    %v189 = vand.u32 %v166, 65535
    %v190 = vshrl.u32 %v166, 16
    %v191 = vand.u32 %v161, 65535
    %v192 = vshrl.u32 %v161, 16
    %v193 = vmul.u32 %v189, %v191
    %v194 = vmul.u32 %v189, %v192
    %v195 = vmul.u32 %v190, %v191
    %v196 = vmul.u32 %v190, %v192
    %v197 = vshll.u32 %v194, 16
    %v198 = vshrl.u32 %v194, 16
    %v199 = vshll.u32 %v195, 16
    %v200 = vshrl.u32 %v195, 16
    %vm201 = vc.u32 %v193, %v197
    %v202 = vsel %vm201, 1, 0
    %v203 = vadd.s32 %v193, %v197
    %v204 = vadd.s32 %v196, %v202
    %vm205 = vc.u32 %v203, %v199
    %v206 = vsel %vm205, 1, 0
    %v207 = vadd.s32 %v203, %v199
    %v208 = vadd.s32 %v204, %v206
    %v209 = vadd.s32 %v208, %v198
    %v210 = vadd.s32 %v209, %v200
    %v211 = vmul.u32 %v166, %v157
    %v212 = vadd.s32 %v188, %v207
    %vm213 = vc.u32 %v188, %v207
    %v214 = vadd.s32 %v210, 1
    %v215 = vsel %vm213, %v214, %v210
    %v216 = vadd.s32 %v211, %v215
    %v217 = vadd.s32 %v216, 536870912
    %v218 = vshrl.u32 %v217, 30
    %v219 = vshll.u32 %v218, 30
    %v220 = vsub.s32 %v216, %v219
    %vm221 = vcmp.lt.s32.totalorder %v220, 0
    %v222 = vsub.s32 0, %v220
    %v223 = vsel %vm221, %v222, %v220
    %v224 = vclz %v223
    %v225 = vsub.s32 %v224, 2
    %vm226 = vcmp.gt.s32.totalorder 0, %v225
    %v227 = vsel %vm226, 0, %v225
    %v228 = vsub.s32 32, %v227
    %v229 = vshll.u32 %v220, %v227
    %v230 = vshrl.u32 %v212, %v228
    %v231 = vor.u32 %v229, %v230
    %v232 = vsub.s32 4294967266, %v227
    %v233 = vadd.s32 %v232, 127
    %v234 = vshll.u32 %v233, 23
    %v235 = vor.u32 4788187, %v234
    %v236 = vand.u32 2147483647, %v235
    %v238 = vcvt.s32.f32 %v231
    %v239 = vmul.f32 %v238, %v236
    %v240 = vxor.u32 %v239, 2147483648
    %v241 = vsel %vm120, %v240, %v239
    %v242 = vsub.s32 4, %v218
    %v243 = vsel %vm120, %v242, %v218
    %v244 = vsel %vm119, %v117, %v241
    %v245 = vsel %vm119, 0, %v243
    %v246 = vmul.f32 %v244, %v244
    %v247 = vmul.f32 %v246, -0.001358992
    %v248 = vadd.f32 %v247, 0.041655596
    %v249 = vmul.f32 %v246, %v248
    %v250 = vadd.f32 %v249, -0.4999988
    %v251 = vmul.f32 %v246, %v250
    %v252 = vadd.f32 1.0, %v251
    %v253 = vmul.f32 %v244, %v244
    %v254 = vmul.f32 %v253, -0.00019511016
    %v255 = vadd.f32 %v254, 0.008332121
    %v256 = vmul.f32 %v253, %v255
    %v257 = vadd.f32 %v256, -0.16666654
    %v258 = vmul.f32 %v253, %v257
    %v259 = vadd.f32 %v258, 1.0
    %v260 = vmul.f32 %v259, %v244
    %vm261 = vweird.f32 %v117
    %v262 = vadd.s32 %v245, 3
    %v263 = vand.u32 %v262, 3
    %vm264 = vcmp.lt.s32.totalorder %v263, 2
    %vm265 = vcmp.eq.s32.totalorder %v263, 0
    %v266 = vxor.u32 %v260, 2147483648
    %v267 = vsel %vm265, %v252, %v266
    %vm268 = vcmp.eq.s32.totalorder %v263, 2
    %v269 = vxor.u32 %v252, 2147483648
    %v270 = vsel %vm268, %v269, %v260
    %v271 = vsel %vm264, %v267, %v270
    %v272 = vsel %vm261, nan, %v271
    %v273 = vadd.f32 %v272, %v115
    %v274 = vmax.f32 %v273, 0.0
    %275 = vst [vmem:[#allocation8] sm:$0xff] %v274
    // Predicated region
    $region26: #{sine_residual_block_prepared.1} parent=1 // pred_check
      _
    $region27: #{sine_residual_block_prepared.1} parent=1 // pred_check_branch
      %277 = sbr.rel (0) target = $region29
    $region28: #{sine_residual_block_prepared.1} parent=1 // pred_region
      %279 = vsyncadd [#allocation4], 0
      %s281 = sshll.u32 [#allocation8], 4
      %s282 = int_to_ptr.vmem [resolvable:$true] %s281
      %s283 = sshll.u32 %s3, 4
      %s284 = int_to_ptr.hbm [resolvable:$true] %s283
      %286 = dma.vmem_to_hbm [thread:$0]  %s282, 128, %s284, [#allocation4]
    $region29: #{sine_residual_block_prepared.1} parent=1 // pred_fallthru
      _
    // Predicated region
    $region30: #{sine_residual_block_prepared.1} parent=1 // pred_check
      _
    $region31: #{sine_residual_block_prepared.1} parent=1 // pred_check_branch
      %288 = sbr.rel (0) target = $region33
    $region32: #{sine_residual_block_prepared.1} parent=1 // pred_region
      %290 = dma.done [#allocation4], 128
    $region33: #{sine_residual_block_prepared.1} parent=1 // pred_fallthru
      _
    %291 = vsyncpa [#allocation3], 1
    %292 = vsyncpa [#allocation6], 1
    %293 = vsyncpa [#allocation4], 1

</llo_original>
